<compile_context>
chip_gen: v7x
topology: tpu7x:2x2x1
jax: 0.10.0
libtpu: 0.0.40
codegen_flags: <defaults>
</compile_context>

<pallas_src>
import math

import jax
import jax.numpy as jnp
from jax.experimental import pallas as pl
from jax.experimental.pallas import tpu as pltpu

HIDDEN = 32


def rnn_kernel(x_ref, h0_ref, whh_t_ref, wih_ref, b_ref, wout_ref, bout_ref,
               y_ref, ht_ref):
    # x_ref:     (B, T)  input sequence (input_size == 1, already squeezed)
    # h0_ref:    (B, H)  initial hidden state (batch on sublanes, H on lanes)
    # whh_t_ref: (H, H)  W_hh^T  (so h @ whh_t == h @ W_hh^T)
    # wih_ref:   (1, H)  W_ih^T
    # b_ref:     (1, H)  b_ih + b_hh
    # wout_ref:  (1, H)  output Linear weight
    # bout_ref:  (1, 1)  output Linear bias
    # y_ref:     (B, T)  per-step Linear(32,1) output, lane-dense store
    # ht_ref:    (B, H)  final hidden state
    B, T = x_ref.shape
    H = whh_t_ref.shape[0]

    x = x_ref[...]            # (B, T)
    whh_t = whh_t_ref[...]    # (H, H)
    wih = wih_ref[...]        # (1, H)
    b = b_ref[...]            # (1, H)

    # Per-step input injections, precomputed off the serial chain with static
    # slices only:  inj[t][b, h] = x[b, t] * W_ih^T[0, h] + (b_ih + b_hh)[h]
    inj = [x[:, t:t + 1] * wih + b for t in range(T)]     # T x (B, H)

    # Statically unrolled recurrence; h_t history stays in vregs.
    h = h0_ref[...]                                        # (B, H)
    hs = []
    for t in range(T):
        h = jnp.tanh(
            jnp.dot(h, whh_t, preferred_element_type=jnp.float32) + inj[t])
        hs.append(h)
    ht_ref[...] = h

    # Hoisted output projection: one vectorized pass over all T steps and a
    # single lane-dense (B, T) store.
    h_all = jnp.stack(hs, axis=0)                          # (T, B, H)
    wout = wout_ref[...]                                   # (1, H)
    y_tb = jnp.sum(h_all * wout[None, :, :], axis=-1)      # (T, B)
    y_ref[...] = jnp.transpose(y_tb) + bout_ref[...]       # (B, T) + (1, 1)


def prepare_params(params):
    """One-time parameter preprocessing (hoisted out of the forward)."""
    w_ih, w_hh, b_ih, b_hh, w_out, b_out = params
    H = HIDDEN
    whh_t = jnp.transpose(w_hh).astype(jnp.float32)        # (H, H) == W_hh^T
    wih = w_ih.reshape(1, H).astype(jnp.float32)           # W_ih^T
    b = (b_ih + b_hh).reshape(1, H).astype(jnp.float32)
    wout = w_out.reshape(1, H).astype(jnp.float32)
    bout = b_out.reshape(1, 1).astype(jnp.float32)
    return (whh_t, wih, b, wout, bout)


@jax.jit
def rnn_forward(x, hidden_s, prepped):
    """x: (B, T, 1), hidden_s: (1, B, H) -> ((B, T, 1), (1, B, H))."""
    whh_t, wih, b, wout, bout = prepped
    B, T, _ = x.shape
    H = HIDDEN

    x_bt = x[:, :, 0].astype(jnp.float32)                  # (B, T)
    h0 = hidden_s[0].astype(jnp.float32)                   # (B, H)

    vmem = pl.BlockSpec(memory_space=pltpu.MemorySpace.VMEM)

    y_bt, ht = pl.pallas_call(
        rnn_kernel,
        out_shape=(jax.ShapeDtypeStruct((B, T), jnp.float32),
                   jax.ShapeDtypeStruct((B, H), jnp.float32)),
        in_specs=[vmem] * 7,
        out_specs=(vmem, vmem),
    )(x_bt, h0, whh_t, wih, b, wout, bout)

    out = y_bt[:, :, None]                                 # (B, T, 1)
    hidden = ht[None]                                      # (1, B, H)
    return out, hidden


def rnn_reference(x, hidden_s, params):
    """Pure-JAX reference matching torch.nn.RNN + per-step Linear."""
    w_ih, w_hh, b_ih, b_hh, w_out, b_out = params
    B, T, _ = x.shape
    h = hidden_s[0]
    outs = []
    for t in range(T):
        h = jnp.tanh(x[:, t, :] @ w_ih.T + b_ih + h @ w_hh.T + b_hh)
        outs.append(h @ w_out.T + b_out)
    return jnp.stack(outs, axis=1), h[None]


def init_params(key):
    """Deterministic init mirroring PyTorch default U(-1/sqrt(H), 1/sqrt(H))."""
    H = HIDDEN
    ks = jax.random.split(key, 6)
    bound = 1.0 / math.sqrt(H)
    w_ih = jax.random.uniform(ks[0], (H, 1), jnp.float32, -bound, bound)
    w_hh = jax.random.uniform(ks[1], (H, H), jnp.float32, -bound, bound)
    b_ih = jax.random.uniform(ks[2], (H,), jnp.float32, -bound, bound)
    b_hh = jax.random.uniform(ks[3], (H,), jnp.float32, -bound, bound)
    w_out = jax.random.uniform(ks[4], (1, H), jnp.float32, -bound, bound)
    b_out = jax.random.uniform(ks[5], (1,), jnp.float32, -bound, bound)
    return (w_ih, w_hh, b_ih, b_hh, w_out, b_out)


if __name__ == "__main__":
    B, T, H = 2, 8, HIDDEN
    key = jax.random.PRNGKey(0)
    k_x, k_h, k_p = jax.random.split(key, 3)

    x = jax.random.normal(k_x, (B, T, 1), jnp.float32)
    hidden_s = jax.random.normal(k_h, (1, B, H), jnp.float32)
    params = init_params(k_p)
    prepped = prepare_params(params)

    out, h_final = jax.block_until_ready(rnn_forward(x, hidden_s, prepped))
    out_ref, h_ref = rnn_reference(x, hidden_s, params)

    assert out.shape == (B, T, 1) and h_final.shape == (1, B, H)
    assert jnp.allclose(out, out_ref, atol=1e-5, rtol=1e-5)
    assert jnp.allclose(h_final, h_ref, atol=1e-5, rtol=1e-5)

    print("KERNEL_OK")
</pallas_src>

<mosaic_0001>
module attributes {stable_mosaic.version = 11 : i64} {
  func.func @rnn_kernel(%arg0: memref<2x8xf32, #tpu.memory_space<vmem>>, %arg1: memref<2x32xf32, #tpu.memory_space<vmem>>, %arg2: memref<32x32xf32, #tpu.memory_space<vmem>>, %arg3: memref<1x32xf32, #tpu.memory_space<vmem>>, %arg4: memref<1x32xf32, #tpu.memory_space<vmem>>, %arg5: memref<1x32xf32, #tpu.memory_space<vmem>>, %arg6: memref<1x1xf32, #tpu.memory_space<vmem>>, %arg7: memref<2x8xf32, #tpu.memory_space<vmem>>, %arg8: memref<2x32xf32, #tpu.memory_space<vmem>>) attributes {dimension_semantics = [], scalar_prefetch = 0 : i64, scratch_operands = 0 : i64, tpu.core_type = #tpu.core_type<tc>} {
    %c0 = arith.constant 0 : index
    %c0_0 = arith.constant 0 : index
    %0 = vector.load %arg0[%c0, %c0_0] : memref<2x8xf32, #tpu.memory_space<vmem>>, vector<2x8xf32>
    %c0_1 = arith.constant 0 : index
    %c0_2 = arith.constant 0 : index
    %1 = vector.load %arg2[%c0_1, %c0_2] : memref<32x32xf32, #tpu.memory_space<vmem>>, vector<32x32xf32>
    %c0_3 = arith.constant 0 : index
    %c0_4 = arith.constant 0 : index
    %2 = vector.load %arg3[%c0_3, %c0_4] : memref<1x32xf32, #tpu.memory_space<vmem>>, vector<1x32xf32>
    %c0_5 = arith.constant 0 : index
    %c0_6 = arith.constant 0 : index
    %3 = vector.load %arg4[%c0_5, %c0_6] : memref<1x32xf32, #tpu.memory_space<vmem>>, vector<1x32xf32>
    %4 = vector.extract_strided_slice %0 {offsets = [0, 0], sizes = [2, 1], strides = [1, 1]} : vector<2x8xf32> to vector<2x1xf32>
    %5 = vector.broadcast %4 : vector<2x1xf32> to vector<2x32xf32>
    %6 = vector.broadcast %2 : vector<1x32xf32> to vector<2x32xf32>
    %7 = arith.mulf %5, %6 : vector<2x32xf32>
    %8 = vector.broadcast %3 : vector<1x32xf32> to vector<2x32xf32>
    %9 = arith.addf %7, %8 : vector<2x32xf32>
    %10 = vector.extract_strided_slice %0 {offsets = [0, 1], sizes = [2, 1], strides = [1, 1]} : vector<2x8xf32> to vector<2x1xf32>
    %11 = vector.broadcast %10 : vector<2x1xf32> to vector<2x32xf32>
    %12 = vector.broadcast %2 : vector<1x32xf32> to vector<2x32xf32>
    %13 = arith.mulf %11, %12 : vector<2x32xf32>
    %14 = vector.broadcast %3 : vector<1x32xf32> to vector<2x32xf32>
    %15 = arith.addf %13, %14 : vector<2x32xf32>
    %16 = vector.extract_strided_slice %0 {offsets = [0, 2], sizes = [2, 1], strides = [1, 1]} : vector<2x8xf32> to vector<2x1xf32>
    %17 = vector.broadcast %16 : vector<2x1xf32> to vector<2x32xf32>
    %18 = vector.broadcast %2 : vector<1x32xf32> to vector<2x32xf32>
    %19 = arith.mulf %17, %18 : vector<2x32xf32>
    %20 = vector.broadcast %3 : vector<1x32xf32> to vector<2x32xf32>
    %21 = arith.addf %19, %20 : vector<2x32xf32>
    %22 = vector.extract_strided_slice %0 {offsets = [0, 3], sizes = [2, 1], strides = [1, 1]} : vector<2x8xf32> to vector<2x1xf32>
    %23 = vector.broadcast %22 : vector<2x1xf32> to vector<2x32xf32>
    %24 = vector.broadcast %2 : vector<1x32xf32> to vector<2x32xf32>
    %25 = arith.mulf %23, %24 : vector<2x32xf32>
    %26 = vector.broadcast %3 : vector<1x32xf32> to vector<2x32xf32>
    %27 = arith.addf %25, %26 : vector<2x32xf32>
    %28 = vector.extract_strided_slice %0 {offsets = [0, 4], sizes = [2, 1], strides = [1, 1]} : vector<2x8xf32> to vector<2x1xf32>
    %29 = vector.broadcast %28 : vector<2x1xf32> to vector<2x32xf32>
    %30 = vector.broadcast %2 : vector<1x32xf32> to vector<2x32xf32>
    %31 = arith.mulf %29, %30 : vector<2x32xf32>
    %32 = vector.broadcast %3 : vector<1x32xf32> to vector<2x32xf32>
    %33 = arith.addf %31, %32 : vector<2x32xf32>
    %34 = vector.extract_strided_slice %0 {offsets = [0, 5], sizes = [2, 1], strides = [1, 1]} : vector<2x8xf32> to vector<2x1xf32>
    %35 = vector.broadcast %34 : vector<2x1xf32> to vector<2x32xf32>
    %36 = vector.broadcast %2 : vector<1x32xf32> to vector<2x32xf32>
    %37 = arith.mulf %35, %36 : vector<2x32xf32>
    %38 = vector.broadcast %3 : vector<1x32xf32> to vector<2x32xf32>
    %39 = arith.addf %37, %38 : vector<2x32xf32>
    %40 = vector.extract_strided_slice %0 {offsets = [0, 6], sizes = [2, 1], strides = [1, 1]} : vector<2x8xf32> to vector<2x1xf32>
    %41 = vector.broadcast %40 : vector<2x1xf32> to vector<2x32xf32>
    %42 = vector.broadcast %2 : vector<1x32xf32> to vector<2x32xf32>
    %43 = arith.mulf %41, %42 : vector<2x32xf32>
    %44 = vector.broadcast %3 : vector<1x32xf32> to vector<2x32xf32>
    %45 = arith.addf %43, %44 : vector<2x32xf32>
    %46 = vector.extract_strided_slice %0 {offsets = [0, 7], sizes = [2, 1], strides = [1, 1]} : vector<2x8xf32> to vector<2x1xf32>
    %47 = vector.broadcast %46 : vector<2x1xf32> to vector<2x32xf32>
    %48 = vector.broadcast %2 : vector<1x32xf32> to vector<2x32xf32>
    %49 = arith.mulf %47, %48 : vector<2x32xf32>
    %50 = vector.broadcast %3 : vector<1x32xf32> to vector<2x32xf32>
    %51 = arith.addf %49, %50 : vector<2x32xf32>
    %c0_7 = arith.constant 0 : index
    %c0_8 = arith.constant 0 : index
    %52 = vector.load %arg1[%c0_7, %c0_8] : memref<2x32xf32, #tpu.memory_space<vmem>>, vector<2x32xf32>
    %cst = arith.constant dense<0.000000e+00> : vector<2x32xf32>
    %53 = tpu.matmul %52, %1, %cst {dimension_numbers = #tpu.dot_dimension_numbers<[1], [0], [0], [1], [0, 0, 1, 1], [], []>} : vector<2x32xf32>, vector<32x32xf32>, vector<2x32xf32> -> vector<2x32xf32>
    %54 = arith.addf %53, %9 : vector<2x32xf32>
    %55 = math.tanh %54 : vector<2x32xf32>
    %cst_9 = arith.constant dense<0.000000e+00> : vector<2x32xf32>
    %56 = tpu.matmul %55, %1, %cst_9 {dimension_numbers = #tpu.dot_dimension_numbers<[1], [0], [0], [1], [0, 0, 1, 1], [], []>} : vector<2x32xf32>, vector<32x32xf32>, vector<2x32xf32> -> vector<2x32xf32>
    %57 = arith.addf %56, %15 : vector<2x32xf32>
    %58 = math.tanh %57 : vector<2x32xf32>
    %cst_10 = arith.constant dense<0.000000e+00> : vector<2x32xf32>
    %59 = tpu.matmul %58, %1, %cst_10 {dimension_numbers = #tpu.dot_dimension_numbers<[1], [0], [0], [1], [0, 0, 1, 1], [], []>} : vector<2x32xf32>, vector<32x32xf32>, vector<2x32xf32> -> vector<2x32xf32>
    %60 = arith.addf %59, %21 : vector<2x32xf32>
    %61 = math.tanh %60 : vector<2x32xf32>
    %cst_11 = arith.constant dense<0.000000e+00> : vector<2x32xf32>
    %62 = tpu.matmul %61, %1, %cst_11 {dimension_numbers = #tpu.dot_dimension_numbers<[1], [0], [0], [1], [0, 0, 1, 1], [], []>} : vector<2x32xf32>, vector<32x32xf32>, vector<2x32xf32> -> vector<2x32xf32>
    %63 = arith.addf %62, %27 : vector<2x32xf32>
    %64 = math.tanh %63 : vector<2x32xf32>
    %cst_12 = arith.constant dense<0.000000e+00> : vector<2x32xf32>
    %65 = tpu.matmul %64, %1, %cst_12 {dimension_numbers = #tpu.dot_dimension_numbers<[1], [0], [0], [1], [0, 0, 1, 1], [], []>} : vector<2x32xf32>, vector<32x32xf32>, vector<2x32xf32> -> vector<2x32xf32>
    %66 = arith.addf %65, %33 : vector<2x32xf32>
    %67 = math.tanh %66 : vector<2x32xf32>
    %cst_13 = arith.constant dense<0.000000e+00> : vector<2x32xf32>
    %68 = tpu.matmul %67, %1, %cst_13 {dimension_numbers = #tpu.dot_dimension_numbers<[1], [0], [0], [1], [0, 0, 1, 1], [], []>} : vector<2x32xf32>, vector<32x32xf32>, vector<2x32xf32> -> vector<2x32xf32>
    %69 = arith.addf %68, %39 : vector<2x32xf32>
    %70 = math.tanh %69 : vector<2x32xf32>
    %cst_14 = arith.constant dense<0.000000e+00> : vector<2x32xf32>
    %71 = tpu.matmul %70, %1, %cst_14 {dimension_numbers = #tpu.dot_dimension_numbers<[1], [0], [0], [1], [0, 0, 1, 1], [], []>} : vector<2x32xf32>, vector<32x32xf32>, vector<2x32xf32> -> vector<2x32xf32>
    %72 = arith.addf %71, %45 : vector<2x32xf32>
    %73 = math.tanh %72 : vector<2x32xf32>
    %cst_15 = arith.constant dense<0.000000e+00> : vector<2x32xf32>
    %74 = tpu.matmul %73, %1, %cst_15 {dimension_numbers = #tpu.dot_dimension_numbers<[1], [0], [0], [1], [0, 0, 1, 1], [], []>} : vector<2x32xf32>, vector<32x32xf32>, vector<2x32xf32> -> vector<2x32xf32>
    %75 = arith.addf %74, %51 : vector<2x32xf32>
    %76 = math.tanh %75 : vector<2x32xf32>
    %c0_16 = arith.constant 0 : index
    %c0_17 = arith.constant 0 : index
    %77 = vector.load %arg8[%c0_16, %c0_17] : memref<2x32xf32, #tpu.memory_space<vmem>>, vector<2x32xf32>
    tpu.vector_store %arg8[%c0_16, %c0_17], %76 {strides = array<i32>} : memref<2x32xf32, #tpu.memory_space<vmem>>, vector<2x32xf32>,
    %78 = vector.shape_cast %55 : vector<2x32xf32> to vector<1x2x32xf32>
    %79 = vector.shape_cast %58 : vector<2x32xf32> to vector<1x2x32xf32>
    %80 = vector.shape_cast %61 : vector<2x32xf32> to vector<1x2x32xf32>
    %81 = vector.shape_cast %64 : vector<2x32xf32> to vector<1x2x32xf32>
    %82 = vector.shape_cast %67 : vector<2x32xf32> to vector<1x2x32xf32>
    %83 = vector.shape_cast %70 : vector<2x32xf32> to vector<1x2x32xf32>
    %84 = vector.shape_cast %73 : vector<2x32xf32> to vector<1x2x32xf32>
    %85 = vector.shape_cast %76 : vector<2x32xf32> to vector<1x2x32xf32>
    %86 = tpu.concatenate %78, %79, %80, %81, %82, %83, %84, %85 in 0 : vector<1x2x32xf32>, vector<1x2x32xf32>, vector<1x2x32xf32>, vector<1x2x32xf32>, vector<1x2x32xf32>, vector<1x2x32xf32>, vector<1x2x32xf32>, vector<1x2x32xf32> -> vector<8x2x32xf32>
    %c0_18 = arith.constant 0 : index
    %c0_19 = arith.constant 0 : index
    %87 = vector.load %arg5[%c0_18, %c0_19] : memref<1x32xf32, #tpu.memory_space<vmem>>, vector<1x32xf32>
    %88 = vector.shape_cast %87 : vector<1x32xf32> to vector<1x1x32xf32>
    %89 = vector.broadcast %88 : vector<1x1x32xf32> to vector<8x2x32xf32>
    %90 = arith.mulf %86, %89 : vector<8x2x32xf32>
    %cst_20 = arith.constant dense<0.000000e+00> : vector<8x2xf32>
    %91 = vector.multi_reduction <add>, %90, %cst_20 [2] : vector<8x2x32xf32> to vector<8x2xf32>
    %92 = tpu.transpose %91, [1, 0] : vector<8x2xf32> -> vector<2x8xf32>
    %c0_21 = arith.constant 0 : index
    %c0_22 = arith.constant 0 : index
    %93 = vector.load %arg6[%c0_21, %c0_22] : memref<1x1xf32, #tpu.memory_space<vmem>>, vector<1x1xf32>
    %94 = vector.broadcast %93 : vector<1x1xf32> to vector<2x8xf32>
    %95 = arith.addf %92, %94 : vector<2x8xf32>
    %c0_23 = arith.constant 0 : index
    %c0_24 = arith.constant 0 : index
    %96 = vector.load %arg7[%c0_23, %c0_24] : memref<2x8xf32, #tpu.memory_space<vmem>>, vector<2x8xf32>
    tpu.vector_store %arg7[%c0_23, %c0_24], %95 {strides = array<i32>} : memref<2x8xf32, #tpu.memory_space<vmem>>, vector<2x8xf32>,
    return
  }
}

</mosaic_0001>

<llo_original>
// kernel: rnn_forward.1
$region0: #{rnn_forward.1}
  #allocation0 [shape = 'u32[]', space=smem, size = 0x4, offset = 0x4, fixed_abs, tag = 'smem constant byte address 0x4 - core index']
  #allocation1 [shape = 'u32[144,128]{1,0:T(1,128)}', space=vmem, size = 0x12000, scoped, tag = 'internal scratch']
  #allocation2 [shape = 'f32[1,1]{1,0:T(1,128)S(1)}', space=vmem, size = 0x200, scoped, tag = 'scoped memory for rnn_forward.1']
  %s0 = inlined_call_operand.vmem [shape: f32[2,8], index: 0, kind: input, shape index: {}]
  %s1 = inlined_call_operand.vmem [shape: f32[2,32], index: 1, kind: input, shape index: {}]
  %s2 = inlined_call_operand.hbm [shape: f32[32,32], index: 2, kind: input, shape index: {}]
  %s3 = inlined_call_operand.vmem [shape: f32[1,32], index: 3, kind: input, shape index: {}]
  %s4 = inlined_call_operand.vmem [shape: f32[1,32], index: 4, kind: input, shape index: {}]
  %s5 = inlined_call_operand.vmem [shape: f32[1,32], index: 5, kind: input, shape index: {}]
  %s6 = inlined_call_operand.<no memory space> [shape: f32[1,1], index: 6, kind: input, shape index: {}]
  %s7 = inlined_call_operand.hbm [shape: f32[2,8], index: 7, kind: output, shape index: {0}]
  %s8 = inlined_call_operand.hbm [shape: f32[2,32], index: 8, kind: output, shape index: {1}]
  %9 = xla_tuple %s7, %s8
  %s10 = sld [smem:[#allocation0]]
  $region50: #{rnn_forward.1} parent=0
    _
  %s12 = ssub.s32 1, %s10
  %s13 = scalar_select 0, %s12, %s10
  %v14 = vstv %s6
  %15 = vst [vmem:[#allocation2] sm:$0x1] %v14
  $region1: #{rnn_forward.1} parent=0
    #allocation3 [shape = 'u8[16384]{0}', space=vmem, size = 0x4000, scoped, tag = 'input window, operand 2, single buffered']
    #allocation4 [shape = 's32[1]{0}', space=sflag, size = 0x4, scoped, tag = 'scoped memory for rnn_forward.1']
    #allocation5 [shape = 's32[1]{0}', space=sflag, size = 0x4, scoped, tag = 'scoped memory for rnn_forward.1']
    #allocation6 [shape = 'u8[1024]{0}', space=vmem, size = 0x400, scoped, tag = 'output window, operand 0, single buffered']
    #allocation7 [shape = 'u8[1024]{0}', space=vmem, size = 0x400, scoped, tag = 'output window, operand 1, single buffered']
    #allocation8 [shape = 's32[1]{0}', space=sflag, size = 0x4, scoped, tag = 'scoped memory for rnn_forward.1']
    %16 = vsyncpa [#allocation4], 0
    %17 = vsyncpa [#allocation5], 0
    %18 = vsyncpa [#allocation8], 0
    // Predicated region
    $region2: #{rnn_forward.1} parent=1 // pred_check
      _
    $region3: #{rnn_forward.1} parent=1 // pred_check_branch
      %20 = sbr.rel (0) target = $region5
    $region4: #{rnn_forward.1} parent=1 // pred_region
      _
    $region5: #{rnn_forward.1} parent=1 // pred_fallthru
      _
    // Predicated region
    $region6: #{rnn_forward.1} parent=1 // pred_check
      _
    $region7: #{rnn_forward.1} parent=1 // pred_check_branch
      %22 = sbr.rel (0) target = $region9
    $region8: #{rnn_forward.1} parent=1 // pred_region
      _
    $region9: #{rnn_forward.1} parent=1 // pred_fallthru
      _
    // Predicated region
    $region10: #{rnn_forward.1} parent=1 // pred_check
      _
    $region11: #{rnn_forward.1} parent=1 // pred_check_branch
      %24 = sbr.rel (0) target = $region13
    $region12: #{rnn_forward.1} parent=1 // pred_region
      %s26 = ssub.s32 512, 512
      %27 = vsyncadd [#allocation4], %s26
      %s28 = sshll.u32 [#allocation3], 4
      %s29 = int_to_ptr.vmem [resolvable:$true] %s28
      %34 = dma.hbm_to_vmem [thread:$0]  %s2, 512, %s29, [#allocation4], 128, 128, 8
    $region13: #{rnn_forward.1} parent=1 // pred_fallthru
      _
    // Predicated region
    $region14: #{rnn_forward.1} parent=1 // pred_check
      _
    $region15: #{rnn_forward.1} parent=1 // pred_check_branch
      %36 = sbr.rel (0) target = $region17
    $region16: #{rnn_forward.1} parent=1 // pred_region
      _
    $region17: #{rnn_forward.1} parent=1 // pred_fallthru
      _
    // Predicated region
    $region18: #{rnn_forward.1} parent=1 // pred_check
      _
    $region19: #{rnn_forward.1} parent=1 // pred_check_branch
      %38 = sbr.rel (0) target = $region21
    $region20: #{rnn_forward.1} parent=1 // pred_region
      _
    $region21: #{rnn_forward.1} parent=1 // pred_fallthru
      _
    // Predicated region
    $region22: #{rnn_forward.1} parent=1 // pred_check
      _
    $region23: #{rnn_forward.1} parent=1 // pred_check_branch
      %40 = sbr.rel (0) target = $region25
    $region24: #{rnn_forward.1} parent=1 // pred_region
      _
    $region25: #{rnn_forward.1} parent=1 // pred_fallthru
      _
    // Predicated region
    $region26: #{rnn_forward.1} parent=1 // pred_check
      _
    $region27: #{rnn_forward.1} parent=1 // pred_check_branch
      %42 = sbr.rel (0) target = $region29
    $region28: #{rnn_forward.1} parent=1 // pred_region
      _
    $region29: #{rnn_forward.1} parent=1 // pred_fallthru
      _
    // Predicated region
    $region30: #{rnn_forward.1} parent=1 // pred_check
      _
    $region31: #{rnn_forward.1} parent=1 // pred_check_branch
      %44 = sbr.rel (0) target = $region33
    $region32: #{rnn_forward.1} parent=1 // pred_region
      %45 = dma.done [#allocation4], 512
    $region33: #{rnn_forward.1} parent=1 // pred_fallthru
      _
    %v46 = vld [vmem:[%s0] sm:$0x3]
    %v47 = vld [vmem:[#allocation3] sm:$0xff]
    %v48 = vld [vmem:[#allocation3 + $0x8] sm:$0xff]
    %v49 = vld [vmem:[#allocation3 + $0x10] sm:$0xff]
    %v50 = vld [vmem:[#allocation3 + $0x18] sm:$0xff]
    %v51 = vld [vmem:[%s3] sm:$0x1]
    %v52 = vld [vmem:[%s4] sm:$0x1]
    %54 = vset.pattern.permute.xlu0 0
    %55 = vperm.xlu0 %54, %v46
    %v56 = vpop.permute.xlu0 %55
    %v59 = vlaneseq
    %v60 = vshrl.u32 %v59, 7
    %v61 = vsub.s32 0, %v60
    %v62 = vrot.slane %v51, %v61
    %v64 = vmul.f32 %v56, %v62
    %v66 = vlaneseq
    %v67 = vshrl.u32 %v66, 7
    %v68 = vsub.s32 0, %v67
    %v69 = vrot.slane %v52, %v68
    %v71 = vadd.f32 %v64, %v69
    %72 = vset.pattern.permute.xlu0 1
    %73 = vperm.xlu0 %72, %v46
    %v74 = vpop.permute.xlu0 %73
    %v76 = vmul.f32 %v74, %v62
    %v77 = vadd.f32 %v76, %v69
    %78 = vset.pattern.permute.xlu0 2
    %79 = vperm.xlu0 %78, %v46
    %v80 = vpop.permute.xlu0 %79
    %v82 = vmul.f32 %v80, %v62
    %v83 = vadd.f32 %v82, %v69
    %84 = vset.pattern.permute.xlu0 3
    %85 = vperm.xlu0 %84, %v46
    %v86 = vpop.permute.xlu0 %85
    %v88 = vmul.f32 %v86, %v62
    %v89 = vadd.f32 %v88, %v69
    %90 = vset.pattern.permute.xlu0 4
    %91 = vperm.xlu0 %90, %v46
    %v92 = vpop.permute.xlu0 %91
    %v94 = vmul.f32 %v92, %v62
    %v95 = vadd.f32 %v94, %v69
    %96 = vset.pattern.permute.xlu0 5
    %97 = vperm.xlu0 %96, %v46
    %v98 = vpop.permute.xlu0 %97
    %v100 = vmul.f32 %v98, %v62
    %v101 = vadd.f32 %v100, %v69
    %102 = vset.pattern.permute.xlu0 6
    %103 = vperm.xlu0 %102, %v46
    %v104 = vpop.permute.xlu0 %103
    %v106 = vmul.f32 %v104, %v62
    %v107 = vadd.f32 %v106, %v69
    %108 = vset.pattern.permute.xlu0 7
    %109 = vperm.xlu0 %108, %v46
    %v110 = vpop.permute.xlu0 %109
    %v112 = vmul.f32 %v110, %v62
    %v113 = vadd.f32 %v112, %v69
    %v114 = vld [vmem:[%s1] sm:$0x3]
    %vm115 = vcmask 261120
    %v117 = vsel %vm115, %v114, 0
    %119 = vmatprep.subr.mxu0 0.0
    %120 = vmatpush1.msra.mxu0 %v47
    %121 = vmatprep.subr.mxu0 0.0
    %122 = vmatpush1.msra.mxu0 %v48
    %123 = vmatprep.subr.mxu0 0.0
    %124 = vmatpush1.msra.mxu0 %v49
    %125 = vmatprep.subr.mxu0 0.0
    %126 = vmatpush1.msra.mxu0 %v50
    %127 = vmatprep.subr.mxu0 0.0
    %128 = vmatpush1.msra.mxu0 0.0
    %129 = vmatprep.subr.mxu0 0.0
    %130 = vmatpush1.msra.mxu0 0.0
    %131 = vmatprep.subr.mxu0 0.0
    %132 = vmatpush1.msra.mxu0 0.0
    %133 = vmatprep.subr.mxu0 0.0
    %134 = vmatpush1.msra.mxu0 0.0
    %135 = vmatprep.subr.mxu0 0.0
    %136 = vmatpush1.msra.mxu0 0.0
    %137 = vmatprep.subr.mxu0 0.0
    %138 = vmatpush1.msra.mxu0 0.0
    %139 = vmatprep.subr.mxu0 0.0
    %140 = vmatpush1.msra.mxu0 0.0
    %141 = vmatprep.subr.mxu0 0.0
    %142 = vmatpush1.msra.mxu0 0.0
    %143 = vmatprep.subr.mxu0 0.0
    %144 = vmatpush1.msra.mxu0 0.0
    %145 = vmatprep.subr.mxu0 0.0
    %146 = vmatpush1.msra.mxu0 0.0
    %147 = vmatprep.subr.mxu0 0.0
    %148 = vmatpush1.msra.mxu0 0.0
    %149 = vmatprep.subr.mxu0 0.0
    %150 = vmatpush1.msra.mxu0 0.0
    %151 = vmatprep.subr.mxu0 0.0
    %152 = vmatpush1.msra.mxu0 0.0
    %153 = vmatprep.subr.mxu0 0.0
    %154 = vmatpush1.msra.mxu0 0.0
    %155 = vmatprep.subr.mxu0 0.0
    %156 = vmatpush1.msra.mxu0 0.0
    %157 = vmatprep.subr.mxu0 0.0
    %158 = vmatpush1.msra.mxu0 0.0
    %159 = vmatprep.subr.mxu0 0.0
    %160 = vmatpush1.msra.mxu0 0.0
    %161 = vmatprep.subr.mxu0 0.0
    %162 = vmatpush1.msra.mxu0 0.0
    %163 = vmatprep.subr.mxu0 0.0
    %164 = vmatpush1.msra.mxu0 0.0
    %165 = vmatprep.subr.mxu0 0.0
    %166 = vmatpush1.msra.mxu0 0.0
    %167 = vmatprep.subr.mxu0 0.0
    %168 = vmatpush1.msra.mxu0 0.0
    %169 = vmatprep.subr.mxu0 0.0
    %170 = vmatpush1.msra.mxu0 0.0
    %171 = vmatprep.subr.mxu0 0.0
    %172 = vmatpush1.msra.mxu0 0.0
    %173 = vmatprep.subr.mxu0 0.0
    %174 = vmatpush1.msra.mxu0 0.0
    %175 = vmatprep.subr.mxu0 0.0
    %176 = vmatpush1.msra.mxu0 0.0
    %177 = vmatprep.subr.mxu0 0.0
    %178 = vmatpush1.msra.mxu0 0.0
    %179 = vmatprep.subr.mxu0 0.0
    %180 = vmatpush1.msra.mxu0 0.0
    %181 = vmatprep.subr.mxu0 0.0
    %182 = vmatpush1.msra.mxu0 0.0
    %183 = vmatprep.mubr.f32.mxu0 0.0
    %184 = vmatmul.mubr.f32.gmra.mrb[0].mxu0 %v117
    %v185 = vpop.f32.mrb[0].mxu0
    %v186 = vadd.f32 %v71, %v185
    %v187 = vpop.f32.mrb[0].mxu0
    %188 = vdwg.mxu0
    %v189 = vtanh.pop %v186
    %v191 = vsel %vm115, %v189, 0
    %193 = vmatprep.subr.mxu0 0.0
    %194 = vmatpush1.msra.mxu0 %v47
    %195 = vmatprep.subr.mxu0 0.0
    %196 = vmatpush1.msra.mxu0 %v48
    %197 = vmatprep.subr.mxu0 0.0
    %198 = vmatpush1.msra.mxu0 %v49
    %199 = vmatprep.subr.mxu0 0.0
    %200 = vmatpush1.msra.mxu0 %v50
    %201 = vmatprep.subr.mxu0 0.0
    %202 = vmatpush1.msra.mxu0 0.0
    %203 = vmatprep.subr.mxu0 0.0
    %204 = vmatpush1.msra.mxu0 0.0
    %205 = vmatprep.subr.mxu0 0.0
    %206 = vmatpush1.msra.mxu0 0.0
    %207 = vmatprep.subr.mxu0 0.0
    %208 = vmatpush1.msra.mxu0 0.0
    %209 = vmatprep.subr.mxu0 0.0
    %210 = vmatpush1.msra.mxu0 0.0
    %211 = vmatprep.subr.mxu0 0.0
    %212 = vmatpush1.msra.mxu0 0.0
    %213 = vmatprep.subr.mxu0 0.0
    %214 = vmatpush1.msra.mxu0 0.0
    %215 = vmatprep.subr.mxu0 0.0
    %216 = vmatpush1.msra.mxu0 0.0
    %217 = vmatprep.subr.mxu0 0.0
    %218 = vmatpush1.msra.mxu0 0.0
    %219 = vmatprep.subr.mxu0 0.0
    %220 = vmatpush1.msra.mxu0 0.0
    %221 = vmatprep.subr.mxu0 0.0
    %222 = vmatpush1.msra.mxu0 0.0
    %223 = vmatprep.subr.mxu0 0.0
    %224 = vmatpush1.msra.mxu0 0.0
    %225 = vmatprep.subr.mxu0 0.0
    %226 = vmatpush1.msra.mxu0 0.0
    %227 = vmatprep.subr.mxu0 0.0
    %228 = vmatpush1.msra.mxu0 0.0
    %229 = vmatprep.subr.mxu0 0.0
    %230 = vmatpush1.msra.mxu0 0.0
    %231 = vmatprep.subr.mxu0 0.0
    %232 = vmatpush1.msra.mxu0 0.0
    %233 = vmatprep.subr.mxu0 0.0
    %234 = vmatpush1.msra.mxu0 0.0
    %235 = vmatprep.subr.mxu0 0.0
    %236 = vmatpush1.msra.mxu0 0.0
    %237 = vmatprep.subr.mxu0 0.0
    %238 = vmatpush1.msra.mxu0 0.0
    %239 = vmatprep.subr.mxu0 0.0
    %240 = vmatpush1.msra.mxu0 0.0
    %241 = vmatprep.subr.mxu0 0.0
    %242 = vmatpush1.msra.mxu0 0.0
    %243 = vmatprep.subr.mxu0 0.0
    %244 = vmatpush1.msra.mxu0 0.0
    %245 = vmatprep.subr.mxu0 0.0
    %246 = vmatpush1.msra.mxu0 0.0
    %247 = vmatprep.subr.mxu0 0.0
    %248 = vmatpush1.msra.mxu0 0.0
    %249 = vmatprep.subr.mxu0 0.0
    %250 = vmatpush1.msra.mxu0 0.0
    %251 = vmatprep.subr.mxu0 0.0
    %252 = vmatpush1.msra.mxu0 0.0
    %253 = vmatprep.subr.mxu0 0.0
    %254 = vmatpush1.msra.mxu0 0.0
    %255 = vmatprep.subr.mxu0 0.0
    %256 = vmatpush1.msra.mxu0 0.0
    %257 = vmatprep.mubr.f32.mxu0 0.0
    %258 = vmatmul.mubr.f32.gmra.mrb[0].mxu0 %v191
    %v259 = vpop.f32.mrb[0].mxu0
    %v260 = vadd.f32 %v77, %v259
    %v261 = vpop.f32.mrb[0].mxu0
    %262 = vdwg.mxu0
    %v263 = vtanh.pop %v260
    %v265 = vsel %vm115, %v263, 0
    %267 = vmatprep.subr.mxu0 0.0
    %268 = vmatpush1.msra.mxu0 %v47
    %269 = vmatprep.subr.mxu0 0.0
    %270 = vmatpush1.msra.mxu0 %v48
    %271 = vmatprep.subr.mxu0 0.0
    %272 = vmatpush1.msra.mxu0 %v49
    %273 = vmatprep.subr.mxu0 0.0
    %274 = vmatpush1.msra.mxu0 %v50
    %275 = vmatprep.subr.mxu0 0.0
    %276 = vmatpush1.msra.mxu0 0.0
    %277 = vmatprep.subr.mxu0 0.0
    %278 = vmatpush1.msra.mxu0 0.0
    %279 = vmatprep.subr.mxu0 0.0
    %280 = vmatpush1.msra.mxu0 0.0
    %281 = vmatprep.subr.mxu0 0.0
    %282 = vmatpush1.msra.mxu0 0.0
    %283 = vmatprep.subr.mxu0 0.0
    %284 = vmatpush1.msra.mxu0 0.0
    %285 = vmatprep.subr.mxu0 0.0
    %286 = vmatpush1.msra.mxu0 0.0
    %287 = vmatprep.subr.mxu0 0.0
    %288 = vmatpush1.msra.mxu0 0.0
    %289 = vmatprep.subr.mxu0 0.0
    %290 = vmatpush1.msra.mxu0 0.0
    %291 = vmatprep.subr.mxu0 0.0
    %292 = vmatpush1.msra.mxu0 0.0
    %293 = vmatprep.subr.mxu0 0.0
    %294 = vmatpush1.msra.mxu0 0.0
    %295 = vmatprep.subr.mxu0 0.0
    %296 = vmatpush1.msra.mxu0 0.0
    %297 = vmatprep.subr.mxu0 0.0
    %298 = vmatpush1.msra.mxu0 0.0
    %299 = vmatprep.subr.mxu0 0.0
    %300 = vmatpush1.msra.mxu0 0.0
    %301 = vmatprep.subr.mxu0 0.0
    %302 = vmatpush1.msra.mxu0 0.0
    %303 = vmatprep.subr.mxu0 0.0
    %304 = vmatpush1.msra.mxu0 0.0
    %305 = vmatprep.subr.mxu0 0.0
    %306 = vmatpush1.msra.mxu0 0.0
    %307 = vmatprep.subr.mxu0 0.0
    %308 = vmatpush1.msra.mxu0 0.0
    %309 = vmatprep.subr.mxu0 0.0
    %310 = vmatpush1.msra.mxu0 0.0
    %311 = vmatprep.subr.mxu0 0.0
    %312 = vmatpush1.msra.mxu0 0.0
    %313 = vmatprep.subr.mxu0 0.0
    %314 = vmatpush1.msra.mxu0 0.0
    %315 = vmatprep.subr.mxu0 0.0
    %316 = vmatpush1.msra.mxu0 0.0
    %317 = vmatprep.subr.mxu0 0.0
    %318 = vmatpush1.msra.mxu0 0.0
    %319 = vmatprep.subr.mxu0 0.0
    %320 = vmatpush1.msra.mxu0 0.0
    %321 = vmatprep.subr.mxu0 0.0
    %322 = vmatpush1.msra.mxu0 0.0
    %323 = vmatprep.subr.mxu0 0.0
    %324 = vmatpush1.msra.mxu0 0.0
    %325 = vmatprep.subr.mxu0 0.0
    %326 = vmatpush1.msra.mxu0 0.0
    %327 = vmatprep.subr.mxu0 0.0
    %328 = vmatpush1.msra.mxu0 0.0
    %329 = vmatprep.subr.mxu0 0.0
    %330 = vmatpush1.msra.mxu0 0.0
    %331 = vmatprep.mubr.f32.mxu0 0.0
    %332 = vmatmul.mubr.f32.gmra.mrb[0].mxu0 %v265
    %v333 = vpop.f32.mrb[0].mxu0
    %v334 = vadd.f32 %v83, %v333
    %v335 = vpop.f32.mrb[0].mxu0
    %336 = vdwg.mxu0
    %v337 = vtanh.pop %v334
    %v339 = vsel %vm115, %v337, 0
    %341 = vmatprep.subr.mxu0 0.0
    %342 = vmatpush1.msra.mxu0 %v47
    %343 = vmatprep.subr.mxu0 0.0
    %344 = vmatpush1.msra.mxu0 %v48
    %345 = vmatprep.subr.mxu0 0.0
    %346 = vmatpush1.msra.mxu0 %v49
    %347 = vmatprep.subr.mxu0 0.0
    %348 = vmatpush1.msra.mxu0 %v50
    %349 = vmatprep.subr.mxu0 0.0
    %350 = vmatpush1.msra.mxu0 0.0
    %351 = vmatprep.subr.mxu0 0.0
    %352 = vmatpush1.msra.mxu0 0.0
    %353 = vmatprep.subr.mxu0 0.0
    %354 = vmatpush1.msra.mxu0 0.0
    %355 = vmatprep.subr.mxu0 0.0
    %356 = vmatpush1.msra.mxu0 0.0
    %357 = vmatprep.subr.mxu0 0.0
    %358 = vmatpush1.msra.mxu0 0.0
    %359 = vmatprep.subr.mxu0 0.0
    %360 = vmatpush1.msra.mxu0 0.0
    %361 = vmatprep.subr.mxu0 0.0
    %362 = vmatpush1.msra.mxu0 0.0
    %363 = vmatprep.subr.mxu0 0.0
    %364 = vmatpush1.msra.mxu0 0.0
    %365 = vmatprep.subr.mxu0 0.0
    %366 = vmatpush1.msra.mxu0 0.0
    %367 = vmatprep.subr.mxu0 0.0
    %368 = vmatpush1.msra.mxu0 0.0
    %369 = vmatprep.subr.mxu0 0.0
    %370 = vmatpush1.msra.mxu0 0.0
    %371 = vmatprep.subr.mxu0 0.0
    %372 = vmatpush1.msra.mxu0 0.0
    %373 = vmatprep.subr.mxu0 0.0
    %374 = vmatpush1.msra.mxu0 0.0
    %375 = vmatprep.subr.mxu0 0.0
    %376 = vmatpush1.msra.mxu0 0.0
    %377 = vmatprep.subr.mxu0 0.0
    %378 = vmatpush1.msra.mxu0 0.0
    %379 = vmatprep.subr.mxu0 0.0
    %380 = vmatpush1.msra.mxu0 0.0
    %381 = vmatprep.subr.mxu0 0.0
    %382 = vmatpush1.msra.mxu0 0.0
    %383 = vmatprep.subr.mxu0 0.0
    %384 = vmatpush1.msra.mxu0 0.0
    %385 = vmatprep.subr.mxu0 0.0
    %386 = vmatpush1.msra.mxu0 0.0
    %387 = vmatprep.subr.mxu0 0.0
    %388 = vmatpush1.msra.mxu0 0.0
    %389 = vmatprep.subr.mxu0 0.0
    %390 = vmatpush1.msra.mxu0 0.0
    %391 = vmatprep.subr.mxu0 0.0
    %392 = vmatpush1.msra.mxu0 0.0
    %393 = vmatprep.subr.mxu0 0.0
    %394 = vmatpush1.msra.mxu0 0.0
    %395 = vmatprep.subr.mxu0 0.0
    %396 = vmatpush1.msra.mxu0 0.0
    %397 = vmatprep.subr.mxu0 0.0
    %398 = vmatpush1.msra.mxu0 0.0
    %399 = vmatprep.subr.mxu0 0.0
    %400 = vmatpush1.msra.mxu0 0.0
    %401 = vmatprep.subr.mxu0 0.0
    %402 = vmatpush1.msra.mxu0 0.0
    %403 = vmatprep.subr.mxu0 0.0
    %404 = vmatpush1.msra.mxu0 0.0
    %405 = vmatprep.mubr.f32.mxu0 0.0
    %406 = vmatmul.mubr.f32.gmra.mrb[0].mxu0 %v339
    %v407 = vpop.f32.mrb[0].mxu0
    %v408 = vadd.f32 %v89, %v407
    %v409 = vpop.f32.mrb[0].mxu0
    %410 = vdwg.mxu0
    %v411 = vtanh.pop %v408
    %v413 = vsel %vm115, %v411, 0
    %415 = vmatprep.subr.mxu0 0.0
    %416 = vmatpush1.msra.mxu0 %v47
    %417 = vmatprep.subr.mxu0 0.0
    %418 = vmatpush1.msra.mxu0 %v48
    %419 = vmatprep.subr.mxu0 0.0
    %420 = vmatpush1.msra.mxu0 %v49
    %421 = vmatprep.subr.mxu0 0.0
    %422 = vmatpush1.msra.mxu0 %v50
    %423 = vmatprep.subr.mxu0 0.0
    %424 = vmatpush1.msra.mxu0 0.0
    %425 = vmatprep.subr.mxu0 0.0
    %426 = vmatpush1.msra.mxu0 0.0
    %427 = vmatprep.subr.mxu0 0.0
    %428 = vmatpush1.msra.mxu0 0.0
    %429 = vmatprep.subr.mxu0 0.0
    %430 = vmatpush1.msra.mxu0 0.0
    %431 = vmatprep.subr.mxu0 0.0
    %432 = vmatpush1.msra.mxu0 0.0
    %433 = vmatprep.subr.mxu0 0.0
    %434 = vmatpush1.msra.mxu0 0.0
    %435 = vmatprep.subr.mxu0 0.0
    %436 = vmatpush1.msra.mxu0 0.0
    %437 = vmatprep.subr.mxu0 0.0
    %438 = vmatpush1.msra.mxu0 0.0
    %439 = vmatprep.subr.mxu0 0.0
    %440 = vmatpush1.msra.mxu0 0.0
    %441 = vmatprep.subr.mxu0 0.0
    %442 = vmatpush1.msra.mxu0 0.0
    %443 = vmatprep.subr.mxu0 0.0
    %444 = vmatpush1.msra.mxu0 0.0
    %445 = vmatprep.subr.mxu0 0.0
    %446 = vmatpush1.msra.mxu0 0.0
    %447 = vmatprep.subr.mxu0 0.0
    %448 = vmatpush1.msra.mxu0 0.0
    %449 = vmatprep.subr.mxu0 0.0
    %450 = vmatpush1.msra.mxu0 0.0
    %451 = vmatprep.subr.mxu0 0.0
    %452 = vmatpush1.msra.mxu0 0.0
    %453 = vmatprep.subr.mxu0 0.0
    %454 = vmatpush1.msra.mxu0 0.0
    %455 = vmatprep.subr.mxu0 0.0
    %456 = vmatpush1.msra.mxu0 0.0
    %457 = vmatprep.subr.mxu0 0.0
    %458 = vmatpush1.msra.mxu0 0.0
    %459 = vmatprep.subr.mxu0 0.0
    %460 = vmatpush1.msra.mxu0 0.0
    %461 = vmatprep.subr.mxu0 0.0
    %462 = vmatpush1.msra.mxu0 0.0
    %463 = vmatprep.subr.mxu0 0.0
    %464 = vmatpush1.msra.mxu0 0.0
    %465 = vmatprep.subr.mxu0 0.0
    %466 = vmatpush1.msra.mxu0 0.0
    %467 = vmatprep.subr.mxu0 0.0
    %468 = vmatpush1.msra.mxu0 0.0
    %469 = vmatprep.subr.mxu0 0.0
    %470 = vmatpush1.msra.mxu0 0.0
    %471 = vmatprep.subr.mxu0 0.0
    %472 = vmatpush1.msra.mxu0 0.0
    %473 = vmatprep.subr.mxu0 0.0
    %474 = vmatpush1.msra.mxu0 0.0
    %475 = vmatprep.subr.mxu0 0.0
    %476 = vmatpush1.msra.mxu0 0.0
    %477 = vmatprep.subr.mxu0 0.0
    %478 = vmatpush1.msra.mxu0 0.0
    %479 = vmatprep.mubr.f32.mxu0 0.0
    %480 = vmatmul.mubr.f32.gmra.mrb[0].mxu0 %v413
    %v481 = vpop.f32.mrb[0].mxu0
    %v482 = vadd.f32 %v95, %v481
    %v483 = vpop.f32.mrb[0].mxu0
    %484 = vdwg.mxu0
    %v485 = vtanh.pop %v482
    %v487 = vsel %vm115, %v485, 0
    %489 = vmatprep.subr.mxu0 0.0
    %490 = vmatpush1.msra.mxu0 %v47
    %491 = vmatprep.subr.mxu0 0.0
    %492 = vmatpush1.msra.mxu0 %v48
    %493 = vmatprep.subr.mxu0 0.0
    %494 = vmatpush1.msra.mxu0 %v49
    %495 = vmatprep.subr.mxu0 0.0
    %496 = vmatpush1.msra.mxu0 %v50
    %497 = vmatprep.subr.mxu0 0.0
    %498 = vmatpush1.msra.mxu0 0.0
    %499 = vmatprep.subr.mxu0 0.0
    %500 = vmatpush1.msra.mxu0 0.0
    %501 = vmatprep.subr.mxu0 0.0
    %502 = vmatpush1.msra.mxu0 0.0
    %503 = vmatprep.subr.mxu0 0.0
    %504 = vmatpush1.msra.mxu0 0.0
    %505 = vmatprep.subr.mxu0 0.0
    %506 = vmatpush1.msra.mxu0 0.0
    %507 = vmatprep.subr.mxu0 0.0
    %508 = vmatpush1.msra.mxu0 0.0
    %509 = vmatprep.subr.mxu0 0.0
    %510 = vmatpush1.msra.mxu0 0.0
    %511 = vmatprep.subr.mxu0 0.0
    %512 = vmatpush1.msra.mxu0 0.0
    %513 = vmatprep.subr.mxu0 0.0
    %514 = vmatpush1.msra.mxu0 0.0
    %515 = vmatprep.subr.mxu0 0.0
    %516 = vmatpush1.msra.mxu0 0.0
    %517 = vmatprep.subr.mxu0 0.0
    %518 = vmatpush1.msra.mxu0 0.0
    %519 = vmatprep.subr.mxu0 0.0
    %520 = vmatpush1.msra.mxu0 0.0
    %521 = vmatprep.subr.mxu0 0.0
    %522 = vmatpush1.msra.mxu0 0.0
    %523 = vmatprep.subr.mxu0 0.0
    %524 = vmatpush1.msra.mxu0 0.0
    %525 = vmatprep.subr.mxu0 0.0
    %526 = vmatpush1.msra.mxu0 0.0
    %527 = vmatprep.subr.mxu0 0.0
    %528 = vmatpush1.msra.mxu0 0.0
    %529 = vmatprep.subr.mxu0 0.0
    %530 = vmatpush1.msra.mxu0 0.0
    %531 = vmatprep.subr.mxu0 0.0
    %532 = vmatpush1.msra.mxu0 0.0
    %533 = vmatprep.subr.mxu0 0.0
    %534 = vmatpush1.msra.mxu0 0.0
    %535 = vmatprep.subr.mxu0 0.0
    %536 = vmatpush1.msra.mxu0 0.0
    %537 = vmatprep.subr.mxu0 0.0
    %538 = vmatpush1.msra.mxu0 0.0
    %539 = vmatprep.subr.mxu0 0.0
    %540 = vmatpush1.msra.mxu0 0.0
    %541 = vmatprep.subr.mxu0 0.0
    %542 = vmatpush1.msra.mxu0 0.0
    %543 = vmatprep.subr.mxu0 0.0
    %544 = vmatpush1.msra.mxu0 0.0
    %545 = vmatprep.subr.mxu0 0.0
    %546 = vmatpush1.msra.mxu0 0.0
    %547 = vmatprep.subr.mxu0 0.0
    %548 = vmatpush1.msra.mxu0 0.0
    %549 = vmatprep.subr.mxu0 0.0
    %550 = vmatpush1.msra.mxu0 0.0
    %551 = vmatprep.subr.mxu0 0.0
    %552 = vmatpush1.msra.mxu0 0.0
    %553 = vmatprep.mubr.f32.mxu0 0.0
    %554 = vmatmul.mubr.f32.gmra.mrb[0].mxu0 %v487
    %v555 = vpop.f32.mrb[0].mxu0
    %v556 = vadd.f32 %v101, %v555
    %v557 = vpop.f32.mrb[0].mxu0
    %558 = vdwg.mxu0
    %v559 = vtanh.pop %v556
    %v561 = vsel %vm115, %v559, 0
    %563 = vmatprep.subr.mxu0 0.0
    %564 = vmatpush1.msra.mxu0 %v47
    %565 = vmatprep.subr.mxu0 0.0
    %566 = vmatpush1.msra.mxu0 %v48
    %567 = vmatprep.subr.mxu0 0.0
    %568 = vmatpush1.msra.mxu0 %v49
    %569 = vmatprep.subr.mxu0 0.0
    %570 = vmatpush1.msra.mxu0 %v50
    %571 = vmatprep.subr.mxu0 0.0
    %572 = vmatpush1.msra.mxu0 0.0
    %573 = vmatprep.subr.mxu0 0.0
    %574 = vmatpush1.msra.mxu0 0.0
    %575 = vmatprep.subr.mxu0 0.0
    %576 = vmatpush1.msra.mxu0 0.0
    %577 = vmatprep.subr.mxu0 0.0
    %578 = vmatpush1.msra.mxu0 0.0
    %579 = vmatprep.subr.mxu0 0.0
    %580 = vmatpush1.msra.mxu0 0.0
    %581 = vmatprep.subr.mxu0 0.0
    %582 = vmatpush1.msra.mxu0 0.0
    %583 = vmatprep.subr.mxu0 0.0
    %584 = vmatpush1.msra.mxu0 0.0
    %585 = vmatprep.subr.mxu0 0.0
    %586 = vmatpush1.msra.mxu0 0.0
    %587 = vmatprep.subr.mxu0 0.0
    %588 = vmatpush1.msra.mxu0 0.0
    %589 = vmatprep.subr.mxu0 0.0
    %590 = vmatpush1.msra.mxu0 0.0
    %591 = vmatprep.subr.mxu0 0.0
    %592 = vmatpush1.msra.mxu0 0.0
    %593 = vmatprep.subr.mxu0 0.0
    %594 = vmatpush1.msra.mxu0 0.0
    %595 = vmatprep.subr.mxu0 0.0
    %596 = vmatpush1.msra.mxu0 0.0
    %597 = vmatprep.subr.mxu0 0.0
    %598 = vmatpush1.msra.mxu0 0.0
    %599 = vmatprep.subr.mxu0 0.0
    %600 = vmatpush1.msra.mxu0 0.0
    %601 = vmatprep.subr.mxu0 0.0
    %602 = vmatpush1.msra.mxu0 0.0
    %603 = vmatprep.subr.mxu0 0.0
    %604 = vmatpush1.msra.mxu0 0.0
    %605 = vmatprep.subr.mxu0 0.0
    %606 = vmatpush1.msra.mxu0 0.0
    %607 = vmatprep.subr.mxu0 0.0
    %608 = vmatpush1.msra.mxu0 0.0
    %609 = vmatprep.subr.mxu0 0.0
    %610 = vmatpush1.msra.mxu0 0.0
    %611 = vmatprep.subr.mxu0 0.0
    %612 = vmatpush1.msra.mxu0 0.0
    %613 = vmatprep.subr.mxu0 0.0
    %614 = vmatpush1.msra.mxu0 0.0
    %615 = vmatprep.subr.mxu0 0.0
    %616 = vmatpush1.msra.mxu0 0.0
    %617 = vmatprep.subr.mxu0 0.0
    %618 = vmatpush1.msra.mxu0 0.0
    %619 = vmatprep.subr.mxu0 0.0
    %620 = vmatpush1.msra.mxu0 0.0
    %621 = vmatprep.subr.mxu0 0.0
    %622 = vmatpush1.msra.mxu0 0.0
    %623 = vmatprep.subr.mxu0 0.0
    %624 = vmatpush1.msra.mxu0 0.0
    %625 = vmatprep.subr.mxu0 0.0
    %626 = vmatpush1.msra.mxu0 0.0
    %627 = vmatprep.mubr.f32.mxu0 0.0
    %628 = vmatmul.mubr.f32.gmra.mrb[0].mxu0 %v561
    %v629 = vpop.f32.mrb[0].mxu0
    %v630 = vadd.f32 %v107, %v629
    %v631 = vpop.f32.mrb[0].mxu0
    %632 = vdwg.mxu0
    %v633 = vtanh.pop %v630
    %v635 = vsel %vm115, %v633, 0
    %637 = vmatprep.subr.mxu0 0.0
    %638 = vmatpush1.msra.mxu0 %v47
    %639 = vmatprep.subr.mxu0 0.0
    %640 = vmatpush1.msra.mxu0 %v48
    %641 = vmatprep.subr.mxu0 0.0
    %642 = vmatpush1.msra.mxu0 %v49
    %643 = vmatprep.subr.mxu0 0.0
    %644 = vmatpush1.msra.mxu0 %v50
    %645 = vmatprep.subr.mxu0 0.0
    %646 = vmatpush1.msra.mxu0 0.0
    %647 = vmatprep.subr.mxu0 0.0
    %648 = vmatpush1.msra.mxu0 0.0
    %649 = vmatprep.subr.mxu0 0.0
    %650 = vmatpush1.msra.mxu0 0.0
    %651 = vmatprep.subr.mxu0 0.0
    %652 = vmatpush1.msra.mxu0 0.0
    %653 = vmatprep.subr.mxu0 0.0
    %654 = vmatpush1.msra.mxu0 0.0
    %655 = vmatprep.subr.mxu0 0.0
    %656 = vmatpush1.msra.mxu0 0.0
    %657 = vmatprep.subr.mxu0 0.0
    %658 = vmatpush1.msra.mxu0 0.0
    %659 = vmatprep.subr.mxu0 0.0
    %660 = vmatpush1.msra.mxu0 0.0
    %661 = vmatprep.subr.mxu0 0.0
    %662 = vmatpush1.msra.mxu0 0.0
    %663 = vmatprep.subr.mxu0 0.0
    %664 = vmatpush1.msra.mxu0 0.0
    %665 = vmatprep.subr.mxu0 0.0
    %666 = vmatpush1.msra.mxu0 0.0
    %667 = vmatprep.subr.mxu0 0.0
    %668 = vmatpush1.msra.mxu0 0.0
    %669 = vmatprep.subr.mxu0 0.0
    %670 = vmatpush1.msra.mxu0 0.0
    %671 = vmatprep.subr.mxu0 0.0
    %672 = vmatpush1.msra.mxu0 0.0
    %673 = vmatprep.subr.mxu0 0.0
    %674 = vmatpush1.msra.mxu0 0.0
    %675 = vmatprep.subr.mxu0 0.0
    %676 = vmatpush1.msra.mxu0 0.0
    %677 = vmatprep.subr.mxu0 0.0
    %678 = vmatpush1.msra.mxu0 0.0
    %679 = vmatprep.subr.mxu0 0.0
    %680 = vmatpush1.msra.mxu0 0.0
    %681 = vmatprep.subr.mxu0 0.0
    %682 = vmatpush1.msra.mxu0 0.0
    %683 = vmatprep.subr.mxu0 0.0
    %684 = vmatpush1.msra.mxu0 0.0
    %685 = vmatprep.subr.mxu0 0.0
    %686 = vmatpush1.msra.mxu0 0.0
    %687 = vmatprep.subr.mxu0 0.0
    %688 = vmatpush1.msra.mxu0 0.0
    %689 = vmatprep.subr.mxu0 0.0
    %690 = vmatpush1.msra.mxu0 0.0
    %691 = vmatprep.subr.mxu0 0.0
    %692 = vmatpush1.msra.mxu0 0.0
    %693 = vmatprep.subr.mxu0 0.0
    %694 = vmatpush1.msra.mxu0 0.0
    %695 = vmatprep.subr.mxu0 0.0
    %696 = vmatpush1.msra.mxu0 0.0
    %697 = vmatprep.subr.mxu0 0.0
    %698 = vmatpush1.msra.mxu0 0.0
    %699 = vmatprep.subr.mxu0 0.0
    %700 = vmatpush1.msra.mxu0 0.0
    %701 = vmatprep.mubr.f32.mxu0 0.0
    %702 = vmatmul.mubr.f32.gmra.mrb[0].mxu0 %v635
    %v703 = vpop.f32.mrb[0].mxu0
    %v704 = vadd.f32 %v113, %v703
    %v705 = vpop.f32.mrb[0].mxu0
    %706 = vdwg.mxu0
    %v707 = vtanh.pop %v704
    %vm708 = vcmask 254976
    %709 = vst.msk [vmem:[#allocation7] sm:$0x3] %vm708, %v707
    %v710 = vld [vmem:[%s5] sm:$0x1]
    %v712 = vlaneseq
    %v713 = vshrl.u32 %v712, 7
    %v714 = vsub.s32 0, %v713
    %v715 = vrot.slane %v710, %v714
    %v717 = vmul.f32 %v189, %v715
    %v718 = vmul.f32 %v263, %v715
    %v719 = vmul.f32 %v337, %v715
    %v720 = vmul.f32 %v411, %v715
    %v721 = vmul.f32 %v485, %v715
    %v722 = vmul.f32 %v559, %v715
    %v723 = vmul.f32 %v633, %v715
    %v724 = vmul.f32 %v707, %v715
    %v725 = vsel %vm708, %v717, 0.0
    %726 = vadd.xlane.f32.xlu0 %v725
    %v727 = vpop.xlane.xlu0 %726
    %v728 = vsel %vm708, %v718, 0.0
    %729 = vadd.xlane.f32.xlu0 %v728
    %v730 = vpop.xlane.xlu0 %729
    %v731 = vsel %vm708, %v719, 0.0
    %732 = vadd.xlane.f32.xlu0 %v731
    %v733 = vpop.xlane.xlu0 %732
    %v734 = vsel %vm708, %v720, 0.0
    %735 = vadd.xlane.f32.xlu0 %v734
    %v736 = vpop.xlane.xlu0 %735
    %v737 = vsel %vm708, %v721, 0.0
    %738 = vadd.xlane.f32.xlu0 %v737
    %v739 = vpop.xlane.xlu0 %738
    %v740 = vsel %vm708, %v722, 0.0
    %741 = vadd.xlane.f32.xlu0 %v740
    %v742 = vpop.xlane.xlu0 %741
    %v743 = vsel %vm708, %v723, 0.0
    %744 = vadd.xlane.f32.xlu0 %v743
    %v745 = vpop.xlane.xlu0 %744
    %v746 = vsel %vm708, %v724, 0.0
    %747 = vadd.xlane.f32.xlu0 %v746
    %v748 = vpop.xlane.xlu0 %747
    %v757 = vlaneseq
    %v758 = vand.u32 %v757, 127
    %v759 = vlaneseq
    %v760 = vshrl.u32 %v759, 7
    %v761 = vsub.s32 %v758, %v760
    %v762 = vrot.slane %v727, %v761
    %v763 = vlaneseq
    %v764 = vshrl.u32 %v763, 7
    %v765 = vsub.s32 %v758, %v764
    %v766 = vrot.slane %v730, %v765
    %v767 = vlaneseq
    %v768 = vshrl.u32 %v767, 7
    %v769 = vsub.s32 %v758, %v768
    %v770 = vrot.slane %v733, %v769
    %v771 = vlaneseq
    %v772 = vshrl.u32 %v771, 7
    %v773 = vsub.s32 %v758, %v772
    %v774 = vrot.slane %v736, %v773
    %v775 = vlaneseq
    %v776 = vshrl.u32 %v775, 7
    %v777 = vsub.s32 %v758, %v776
    %v778 = vrot.slane %v739, %v777
    %v779 = vlaneseq
    %v780 = vshrl.u32 %v779, 7
    %v781 = vsub.s32 %v758, %v780
    %v782 = vrot.slane %v742, %v781
    %v783 = vlaneseq
    %v784 = vshrl.u32 %v783, 7
    %v785 = vsub.s32 %v758, %v784
    %v786 = vrot.slane %v745, %v785
    %v787 = vlaneseq
    %v788 = vshrl.u32 %v787, 7
    %v789 = vsub.s32 %v758, %v788
    %v790 = vrot.slane %v748, %v789
    %vm791 = vcmask 1041409
    %v792 = vsel %vm791, %v766, %v762
    %vm793 = vcmask 1042434
    %v794 = vsel %vm793, %v770, %v792
    %vm795 = vcmask 1043459
    %v796 = vsel %vm795, %v774, %v794
    %vm797 = vcmask 1044484
    %v798 = vsel %vm797, %v778, %v796
    %vm799 = vcmask 1045509
    %v800 = vsel %vm799, %v782, %v798
    %vm801 = vcmask 1046534
    %v802 = vsel %vm801, %v786, %v800
    %vm803 = vcmask 1047559
    %v804 = vsel %vm803, %v790, %v802
    %806 = vxpose.xlu0.b32.start [1/16] %v804, 128
    %807 = vxpose.xlu0.b32.cont [2/16] 0.0, 128
    %808 = vxpose.xlu0.b32.cont [3/16] 0.0, 128
    %809 = vxpose.xlu0.b32.cont [4/16] 0.0, 128
    %810 = vxpose.xlu0.b32.cont [5/16] 0.0, 128
    %811 = vxpose.xlu0.b32.cont [6/16] 0.0, 128
    %812 = vxpose.xlu0.b32.cont [7/16] 0.0, 128
    %813 = vxpose.xlu0.b32.cont [8/16] 0.0, 128
    %814 = vxpose.xlu0.b32.cont [9/16] 0.0, 128
    %815 = vxpose.xlu0.b32.cont [10/16] 0.0, 128
    %816 = vxpose.xlu0.b32.cont [11/16] 0.0, 128
    %817 = vxpose.xlu0.b32.cont [12/16] 0.0, 128
    %818 = vxpose.xlu0.b32.cont [13/16] 0.0, 128
    %819 = vxpose.xlu0.b32.cont [14/16] 0.0, 128
    %820 = vxpose.xlu0.b32.cont [15/16] 0.0, 128
    %821 = vxpose.xlu0.b32.end [16/16] 0.0, 128
    %v822 = vpop.trf.xlu0
    %v823 = vpop.trf.xlu0
    %v824 = vpop.trf.xlu0
    %v825 = vpop.trf.xlu0
    %v826 = vpop.trf.xlu0
    %v827 = vpop.trf.xlu0
    %v828 = vpop.trf.xlu0
    %v829 = vpop.trf.xlu0
    %v830 = vpop.trf.xlu0
    %v831 = vpop.trf.xlu0
    %v832 = vpop.trf.xlu0
    %v833 = vpop.trf.xlu0
    %v834 = vpop.trf.xlu0
    %v835 = vpop.trf.xlu0
    %v836 = vpop.trf.xlu0
    %v837 = vpop.trf.xlu0
    %v838 = vld [vmem:[#allocation2] sm:$0x1]
    %v840 = vlaneseq
    %v841 = vshrl.u32 %v840, 7
    %v842 = vsub.s32 0, %v841
    %v843 = vrot.slane %v838, %v842
    %844 = vset.pattern.permute.xlu0 0
    %845 = vperm.xlu0 %844, %v843
    %v846 = vpop.permute.xlu0 %845
    %v848 = vadd.f32 %v822, %v846
    %vm849 = vcmask 58368
    %850 = vst.msk [vmem:[#allocation6] sm:$0x3] %vm849, %v848
    // Predicated region
    $region34: #{rnn_forward.1} parent=1 // pred_check
      _
    $region35: #{rnn_forward.1} parent=1 // pred_check_branch
      %852 = sbr.rel (0) target = $region37
    $region36: #{rnn_forward.1} parent=1 // pred_region
      %s854 = ssub.s32 32, 32
      %855 = vsyncadd [#allocation5], %s854
      %s857 = sshll.u32 [#allocation6], 4
      %s858 = int_to_ptr.vmem [resolvable:$true] %s857
      %860 = dma.vmem_to_hbm [thread:$0]  %s858, 32, %s7, [#allocation5]
    $region37: #{rnn_forward.1} parent=1 // pred_fallthru
      _
    // Predicated region
    $region38: #{rnn_forward.1} parent=1 // pred_check
      _
    $region39: #{rnn_forward.1} parent=1 // pred_check_branch
      %862 = sbr.rel (0) target = $region41
    $region40: #{rnn_forward.1} parent=1 // pred_region
      %s864 = ssub.s32 32, 32
      %865 = vsyncadd [#allocation8], %s864
      %s867 = sshll.u32 [#allocation7], 4
      %s868 = int_to_ptr.vmem [resolvable:$true] %s867
      %870 = dma.vmem_to_hbm [thread:$0]  %s868, 32, %s8, [#allocation8]
    $region41: #{rnn_forward.1} parent=1 // pred_fallthru
      _
    // Predicated region
    $region42: #{rnn_forward.1} parent=1 // pred_check
      _
    $region43: #{rnn_forward.1} parent=1 // pred_check_branch
      %872 = sbr.rel (0) target = $region45
    $region44: #{rnn_forward.1} parent=1 // pred_region
      %873 = dma.done [#allocation5], 32
    $region45: #{rnn_forward.1} parent=1 // pred_fallthru
      _
    // Predicated region
    $region46: #{rnn_forward.1} parent=1 // pred_check
      _
    $region47: #{rnn_forward.1} parent=1 // pred_check_branch
      %875 = sbr.rel (0) target = $region49
    $region48: #{rnn_forward.1} parent=1 // pred_region
      %876 = dma.done [#allocation8], 32
    $region49: #{rnn_forward.1} parent=1 // pred_fallthru
      _
    %877 = vsyncpa [#allocation4], 1
    %878 = vsyncpa [#allocation5], 1
    %879 = vsyncpa [#allocation8], 1

</llo_original>
